<compile_context>
chip_gen: v7x
topology: tpu7x:2x2x1
jax: 0.10.0
libtpu: 0.0.40
codegen_flags: <defaults>
</compile_context>

<pallas_src>
import functools

import jax
import jax.numpy as jnp
from jax.experimental import pallas as pl
from jax.experimental.pallas import tpu as pltpu

EPS = 1e-5          # nn.LayerNorm default eps
UP_OUT = 384        # hardcoded up-projection output width in the module


def adapter_kernel(x_ref, g_ref, b_ref, wd_ref, bd_ref, wu_ref, bu_ref, out_ref):
    # Rows are fully independent: a partial last block's out-of-bounds rows
    # may hold garbage, but they never influence valid rows and their stores
    # are masked by Pallas.
    x = x_ref[...].astype(jnp.float32)

    # ---- x_norm: single-pass LayerNorm stats over the feature (last) dim ---
    mean = jnp.mean(x, axis=-1, keepdims=True)
    ex2 = jnp.mean(x * x, axis=-1, keepdims=True)
    var = jnp.maximum(ex2 - mean * mean, 0.0)          # biased var (PyTorch)
    xn = (x - mean) * jax.lax.rsqrt(var + EPS)
    xn = xn * g_ref[...] + b_ref[...]

    mm_dtype = wd_ref.dtype   # bf16 -> native MXU path, f32 accumulation

    # ---- fused down-projection: [unimodal | shared] in one MXU pass --------
    # (TM, D) @ (D, 2*mid) -> (TM, 2*mid), bias add + ReLU in f32.
    h = jnp.dot(xn.astype(mm_dtype), wd_ref[...],
                preferred_element_type=jnp.float32) + bd_ref[...]
    h = jnp.maximum(h, 0.0)
    # dropout: identity in inference mode.
    # TODO(synk): training-mode dropout (pltpu PRNG mask) not implemented.

    # ---- block-diagonal fused up-projection ---------------------------------
    # (TM, 2*mid) @ blockdiag(W_up_uni, W_up_shared) -> (TM, 768), already in
    # concat order [unimodal(384) | shared(384)]; no concatenate, no copy.
    out = jnp.dot(h.astype(mm_dtype), wu_ref[...],
                  preferred_element_type=jnp.float32) + bu_ref[...]

    # ---- final ReLU, lane-dense store ---------------------------------------
    out_ref[...] = jnp.maximum(out, 0.0).astype(out_ref.dtype)


def make_params(key, d_model, middle_dim, dtype=jnp.float32):
    """Linear weights ~ N(0, 0.02), biases zero, LayerNorm gamma=1, beta=0.
    Weights stored as (in_features, out_features) so the kernel does x @ W
    directly (== PyTorch x @ W.T with W:(out, in))."""
    ks = jax.random.split(key, 6)
    std = 0.02
    return {
        "ln_g": jnp.ones((1, d_model), dtype),
        "ln_b": jnp.zeros((1, d_model), dtype),
        "text_down_w":  std * jax.random.normal(ks[0], (d_model, middle_dim), dtype),
        "text_down_b":  jnp.zeros((1, middle_dim), dtype),
        "text_up_w":    std * jax.random.normal(ks[1], (middle_dim, UP_OUT), dtype),
        "text_up_b":    jnp.zeros((1, UP_OUT), dtype),
        "image_down_w": std * jax.random.normal(ks[2], (d_model, middle_dim), dtype),
        "image_down_b": jnp.zeros((1, middle_dim), dtype),
        "image_up_w":   std * jax.random.normal(ks[3], (middle_dim, UP_OUT), dtype),
        "image_up_b":   jnp.zeros((1, UP_OUT), dtype),
        "share_down_w": std * jax.random.normal(ks[4], (d_model, middle_dim), dtype),
        "share_down_b": jnp.zeros((1, middle_dim), dtype),
        "share_up_w":   std * jax.random.normal(ks[5], (middle_dim, UP_OUT), dtype),
        "share_up_b":   jnp.zeros((1, UP_OUT), dtype),
    }


def fuse_adapter_weights(params, mode="text", compute_dtype=jnp.bfloat16):
    """Hoisted out of the per-call path: build the fused down weight/bias and
    the block-diagonal up weight/bias once per (params, mode). Weights are
    stored in bf16 (MXU-native); biases / LN params stay f32 (added to the
    f32 accumulator)."""
    pre = "text" if mode == "text" else "image"
    wdu, bdu = params[f"{pre}_down_w"], params[f"{pre}_down_b"]
    wuu, buu = params[f"{pre}_up_w"], params[f"{pre}_up_b"]
    wds, bds = params["share_down_w"], params["share_down_b"]
    wus, bus = params["share_up_w"], params["share_up_b"]

    mid = wdu.shape[1]
    # hidden layout: [h_unimodal | h_shared]
    w_down = jnp.concatenate([wdu, wds], axis=1).astype(compute_dtype)  # (D, 2*mid)
    b_down = jnp.concatenate([bdu, bds], axis=1).astype(jnp.float32)    # (1, 2*mid)
    # output layout: [unimodal(384) | shared(384)]  (matches torch.cat order)
    w_up = jnp.zeros((2 * mid, 2 * UP_OUT), compute_dtype)
    w_up = w_up.at[:mid, :UP_OUT].set(wuu.astype(compute_dtype))
    w_up = w_up.at[mid:, UP_OUT:].set(wus.astype(compute_dtype))        # (2*mid, 768)
    b_up = jnp.concatenate([buu, bus], axis=1).astype(jnp.float32)      # (1, 768)

    return {
        "ln_g": params["ln_g"].astype(jnp.float32),
        "ln_b": params["ln_b"].astype(jnp.float32),
        "w_down": w_down, "b_down": b_down,
        "w_up": w_up, "b_up": b_up,
    }


@functools.partial(jax.jit, static_argnames=("add_residual", "tm"))
def adapter_forward(x, fused, add_residual=True, tm=1024):
    """Forward pass. add_residual is accepted and ignored exactly like the
    reference PyTorch forward (which never adds a residual nor applies
    multi_norm). Output dtype follows x.dtype."""
    B, S, D = x.shape
    M = B * S
    x2 = x.reshape(M, D)

    w_down, b_down = fused["w_down"], fused["b_down"]
    w_up, b_up = fused["w_up"], fused["b_up"]
    mid2 = w_down.shape[1]

    # Row tile: multiple of 16 (valid f32 and bf16 sublane layouts), targeting
    # >= 4 grid tiles so the "parallel" axis can shard across v7x's two
    # TensorCores. No padding: Pallas masks a partial last block.
    target = ((pl.cdiv(M, 4) + 15) // 16) * 16
    TM = max(16, min((tm // 16) * 16, target))
    n_tiles = pl.cdiv(M, TM)

    row_spec = pl.BlockSpec((TM, D), lambda i: (i, 0))
    out_spec = pl.BlockSpec((TM, 2 * UP_OUT), lambda i: (i, 0))

    def resident(arr):
        # full-shape block, constant index -> stays resident in VMEM.
        # (pipeline_mode=pl.Buffered(1) would halve its footprint; skipped —
        # the fused weights total <1 MiB here, so the win is negligible.)
        return pl.BlockSpec(arr.shape, lambda i: (0, 0))

    args = (x2, fused["ln_g"], fused["ln_b"], w_down, b_down, w_up, b_up)
    in_specs = [row_spec] + [resident(a) for a in args[1:]]

    flops = 2 * M * D * mid2 + 2 * M * mid2 * (2 * UP_OUT) + 10 * M * D
    bytes_accessed = (x2.size * x2.dtype.itemsize
                      + M * 2 * UP_OUT * x.dtype.itemsize
                      + sum(int(a.size) * a.dtype.itemsize for a in args[1:]))

    out = pl.pallas_call(
        adapter_kernel,
        out_shape=jax.ShapeDtypeStruct((M, 2 * UP_OUT), x.dtype),
        grid=(n_tiles,),
        in_specs=in_specs,
        out_specs=out_spec,
        compiler_params=pltpu.CompilerParams(
            dimension_semantics=("parallel",),
            vmem_limit_bytes=48 * 1024 * 1024,
        ),
        cost_estimate=pl.CostEstimate(
            flops=flops, transcendentals=M, bytes_accessed=bytes_accessed),
    )(*args)

    return out.reshape(B, S, 2 * UP_OUT)


def _reference(x, params, mode="text"):
    """Plain-JAX f32 reference for sanity checking."""
    x = x.astype(jnp.float32)
    mean = jnp.mean(x, -1, keepdims=True)
    var = jnp.mean((x - mean) ** 2, -1, keepdims=True)
    xn = (x - mean) * jax.lax.rsqrt(var + EPS) * params["ln_g"][0] + params["ln_b"][0]
    sh = jnp.maximum(xn @ params["share_down_w"] + params["share_down_b"][0], 0.0)
    sh = sh @ params["share_up_w"] + params["share_up_b"][0]
    pre = "text" if mode == "text" else "image"
    un = jnp.maximum(xn @ params[f"{pre}_down_w"] + params[f"{pre}_down_b"][0], 0.0)
    un = un @ params[f"{pre}_up_w"] + params[f"{pre}_up_b"][0]
    return jnp.maximum(jnp.concatenate([un, sh], axis=-1), 0.0)


if __name__ == "__main__":
    key = jax.random.PRNGKey(0)
    kx, kp = jax.random.split(key)

    B, S, D_MODEL, MIDDLE = 2, 32, 128, 64
    x = jax.random.normal(kx, (B, S, D_MODEL), jnp.float32)
    params = make_params(kp, D_MODEL, MIDDLE)

    # Fuse once per (params, mode) -- hoisted out of the per-call path.
    fused_text = fuse_adapter_weights(params, mode="text")
    fused_image = fuse_adapter_weights(params, mode="image")

    out_text = adapter_forward(x, fused_text)
    out_image = adapter_forward(x, fused_image)
    jax.block_until_ready(out_text)
    jax.block_until_ready(out_image)

    ref_text = _reference(x, params, mode="text")
    ref_image = _reference(x, params, mode="image")
    assert out_text.shape == (B, S, 2 * UP_OUT)
    assert bool(jnp.allclose(out_text, ref_text, atol=1e-2, rtol=1e-2))
    assert bool(jnp.allclose(out_image, ref_image, atol=1e-2, rtol=1e-2))

    # Full bf16 I/O path (halves HBM traffic on this memory-bound op).
    x_bf16 = x.astype(jnp.bfloat16)
    out_bf16 = adapter_forward(x_bf16, fused_text)
    jax.block_until_ready(out_bf16)
    assert out_bf16.dtype == jnp.bfloat16
    ref_bf16 = _reference(x_bf16, params, mode="text")
    assert bool(jnp.allclose(out_bf16.astype(jnp.float32), ref_bf16,
                             atol=3e-2, rtol=3e-2))

    print("KERNEL_OK")
</pallas_src>

<mosaic_0001>
module attributes {stable_mosaic.version = 11 : i64} {
  func.func @adapter_kernel(%arg0: i32, %arg1: memref<16x128xf32, #tpu.memory_space<vmem>>, %arg2: memref<1x128xf32, #tpu.memory_space<vmem>>, %arg3: memref<1x128xf32, #tpu.memory_space<vmem>>, %arg4: memref<128x128xbf16, #tpu.memory_space<vmem>>, %arg5: memref<1x128xf32, #tpu.memory_space<vmem>>, %arg6: memref<128x768xbf16, #tpu.memory_space<vmem>>, %arg7: memref<1x768xf32, #tpu.memory_space<vmem>>, %arg8: memref<16x768xf32, #tpu.memory_space<vmem>>) attributes {dimension_semantics = [#tpu.dimension_semantics<parallel>], iteration_bounds = array<i64: 4>, scalar_prefetch = 0 : i64, scratch_operands = 0 : i64, tpu.core_type = #tpu.core_type<tc>, window_params = [{transform_indices = @transform_0, window_bounds = array<i64: 16, 128>}, {pipeline_mode = #tpu.pipeline_mode<synchronous>, transform_indices = @transform_1, window_bounds = array<i64: 1, 128>}, {pipeline_mode = #tpu.pipeline_mode<synchronous>, transform_indices = @transform_2, window_bounds = array<i64: 1, 128>}, {pipeline_mode = #tpu.pipeline_mode<synchronous>, transform_indices = @transform_3, window_bounds = array<i64: 128, 128>}, {pipeline_mode = #tpu.pipeline_mode<synchronous>, transform_indices = @transform_4, window_bounds = array<i64: 1, 128>}, {pipeline_mode = #tpu.pipeline_mode<synchronous>, transform_indices = @transform_5, window_bounds = array<i64: 128, 768>}, {pipeline_mode = #tpu.pipeline_mode<synchronous>, transform_indices = @transform_6, window_bounds = array<i64: 1, 768>}, {transform_indices = @transform_7, window_bounds = array<i64: 16, 768>}]} {
    %c0 = arith.constant 0 : index
    %c0_0 = arith.constant 0 : index
    %0 = vector.load %arg1[%c0, %c0_0] : memref<16x128xf32, #tpu.memory_space<vmem>>, vector<16x128xf32>
    %cst = arith.constant dense<0.000000e+00> : vector<16xf32>
    %1 = vector.multi_reduction <add>, %0, %cst [1] : vector<16x128xf32> to vector<16xf32>
    %2 = vector.shape_cast %1 : vector<16xf32> to vector<16x1xf32>
    %cst_1 = arith.constant 1.280000e+02 : f32
    %3 = vector.broadcast %cst_1 : f32 to vector<16x1xf32>
    %4 = arith.divf %2, %3 : vector<16x1xf32>
    %5 = arith.mulf %0, %0 : vector<16x128xf32>
    %cst_2 = arith.constant dense<0.000000e+00> : vector<16xf32>
    %6 = vector.multi_reduction <add>, %5, %cst_2 [1] : vector<16x128xf32> to vector<16xf32>
    %7 = vector.shape_cast %6 : vector<16xf32> to vector<16x1xf32>
    %cst_3 = arith.constant 1.280000e+02 : f32
    %8 = vector.broadcast %cst_3 : f32 to vector<16x1xf32>
    %9 = arith.divf %7, %8 : vector<16x1xf32>
    %10 = arith.mulf %4, %4 : vector<16x1xf32>
    %11 = arith.subf %9, %10 : vector<16x1xf32>
    %cst_4 = arith.constant 0.000000e+00 : f32
    %12 = vector.broadcast %cst_4 : f32 to vector<16x1xf32>
    %13 = arith.maximumf %11, %12 : vector<16x1xf32>
    %14 = vector.broadcast %4 : vector<16x1xf32> to vector<16x128xf32>
    %15 = arith.subf %0, %14 : vector<16x128xf32>
    %cst_5 = arith.constant 9.99999974E-6 : f32
    %16 = vector.broadcast %cst_5 : f32 to vector<16x1xf32>
    %17 = arith.addf %13, %16 : vector<16x1xf32>
    %18 = math.rsqrt %17 : vector<16x1xf32>
    %19 = vector.broadcast %18 : vector<16x1xf32> to vector<16x128xf32>
    %20 = arith.mulf %15, %19 : vector<16x128xf32>
    %c0_6 = arith.constant 0 : index
    %c0_7 = arith.constant 0 : index
    %21 = vector.load %arg2[%c0_6, %c0_7] : memref<1x128xf32, #tpu.memory_space<vmem>>, vector<1x128xf32>
    %22 = vector.broadcast %21 : vector<1x128xf32> to vector<16x128xf32>
    %23 = arith.mulf %20, %22 : vector<16x128xf32>
    %c0_8 = arith.constant 0 : index
    %c0_9 = arith.constant 0 : index
    %24 = vector.load %arg3[%c0_8, %c0_9] : memref<1x128xf32, #tpu.memory_space<vmem>>, vector<1x128xf32>
    %25 = vector.broadcast %24 : vector<1x128xf32> to vector<16x128xf32>
    %26 = arith.addf %23, %25 : vector<16x128xf32>
    %27 = arith.truncf %26 : vector<16x128xf32> to vector<16x128xbf16>
    %c0_10 = arith.constant 0 : index
    %c0_11 = arith.constant 0 : index
    %28 = vector.load %arg4[%c0_10, %c0_11] : memref<128x128xbf16, #tpu.memory_space<vmem>>, vector<128x128xbf16>
    %cst_12 = arith.constant dense<0.000000e+00> : vector<16x128xf32>
    %29 = tpu.matmul %27, %28, %cst_12 {dimension_numbers = #tpu.dot_dimension_numbers<[1], [0], [0], [1], [0, 0, 1, 1], [], []>} : vector<16x128xbf16>, vector<128x128xbf16>, vector<16x128xf32> -> vector<16x128xf32>
    %c0_13 = arith.constant 0 : index
    %c0_14 = arith.constant 0 : index
    %30 = vector.load %arg5[%c0_13, %c0_14] : memref<1x128xf32, #tpu.memory_space<vmem>>, vector<1x128xf32>
    %31 = vector.broadcast %30 : vector<1x128xf32> to vector<16x128xf32>
    %32 = arith.addf %29, %31 : vector<16x128xf32>
    %cst_15 = arith.constant 0.000000e+00 : f32
    %33 = vector.broadcast %cst_15 : f32 to vector<16x128xf32>
    %34 = arith.maximumf %32, %33 : vector<16x128xf32>
    %35 = arith.truncf %34 : vector<16x128xf32> to vector<16x128xbf16>
    %c0_16 = arith.constant 0 : index
    %c0_17 = arith.constant 0 : index
    %36 = vector.load %arg6[%c0_16, %c0_17] : memref<128x768xbf16, #tpu.memory_space<vmem>>, vector<128x768xbf16>
    %cst_18 = arith.constant dense<0.000000e+00> : vector<16x768xf32>
    %37 = tpu.matmul %35, %36, %cst_18 {dimension_numbers = #tpu.dot_dimension_numbers<[1], [0], [0], [1], [0, 0, 1, 1], [], []>} : vector<16x128xbf16>, vector<128x768xbf16>, vector<16x768xf32> -> vector<16x768xf32>
    %c0_19 = arith.constant 0 : index
    %c0_20 = arith.constant 0 : index
    %38 = vector.load %arg7[%c0_19, %c0_20] : memref<1x768xf32, #tpu.memory_space<vmem>>, vector<1x768xf32>
    %39 = vector.broadcast %38 : vector<1x768xf32> to vector<16x768xf32>
    %40 = arith.addf %37, %39 : vector<16x768xf32>
    %cst_21 = arith.constant 0.000000e+00 : f32
    %41 = vector.broadcast %cst_21 : f32 to vector<16x768xf32>
    %42 = arith.maximumf %40, %41 : vector<16x768xf32>
    %c0_22 = arith.constant 0 : index
    %c0_23 = arith.constant 0 : index
    %43 = vector.load %arg8[%c0_22, %c0_23] : memref<16x768xf32, #tpu.memory_space<vmem>>, vector<16x768xf32>
    tpu.vector_store %arg8[%c0_22, %c0_23], %42 {strides = array<i32>} : memref<16x768xf32, #tpu.memory_space<vmem>>, vector<16x768xf32>,
    return
  }
  func.func @transform_0(%arg0: i32) -> (i32, i32) {
    %c0_i32 = arith.constant 0 : i32
    %c0_i32_0 = arith.constant 0 : i32
    return %arg0, %c0_i32 : i32, i32
  }
  func.func @transform_1(%arg0: i32) -> (i32, i32) {
    %c0_i32 = arith.constant 0 : i32
    %c0_i32_0 = arith.constant 0 : i32
    %c0_i32_1 = arith.constant 0 : i32
    return %c0_i32, %c0_i32_0 : i32, i32
  }
  func.func @transform_2(%arg0: i32) -> (i32, i32) {
    %c0_i32 = arith.constant 0 : i32
    %c0_i32_0 = arith.constant 0 : i32
    %c0_i32_1 = arith.constant 0 : i32
    return %c0_i32, %c0_i32_0 : i32, i32
  }
  func.func @transform_3(%arg0: i32) -> (i32, i32) {
    %c0_i32 = arith.constant 0 : i32
    %c0_i32_0 = arith.constant 0 : i32
    %c0_i32_1 = arith.constant 0 : i32
    return %c0_i32, %c0_i32_0 : i32, i32
  }
  func.func @transform_4(%arg0: i32) -> (i32, i32) {
    %c0_i32 = arith.constant 0 : i32
    %c0_i32_0 = arith.constant 0 : i32
    %c0_i32_1 = arith.constant 0 : i32
    return %c0_i32, %c0_i32_0 : i32, i32
  }
  func.func @transform_5(%arg0: i32) -> (i32, i32) {
    %c0_i32 = arith.constant 0 : i32
    %c0_i32_0 = arith.constant 0 : i32
    %c0_i32_1 = arith.constant 0 : i32
    return %c0_i32, %c0_i32_0 : i32, i32
  }
  func.func @transform_6(%arg0: i32) -> (i32, i32) {
    %c0_i32 = arith.constant 0 : i32
    %c0_i32_0 = arith.constant 0 : i32
    %c0_i32_1 = arith.constant 0 : i32
    return %c0_i32, %c0_i32_0 : i32, i32
  }
  func.func @transform_7(%arg0: i32) -> (i32, i32) {
    %c0_i32 = arith.constant 0 : i32
    %c0_i32_0 = arith.constant 0 : i32
    return %arg0, %c0_i32 : i32, i32
  }
}

</mosaic_0001>

<llo_original>
// kernel: adapter_forward.1
$region0: #{adapter_forward.1}
  #allocation0 [shape = 'u32[]', space=smem, size = 0x4, offset = 0x4, fixed_abs, tag = 'smem constant byte address 0x4 - core index']
  #allocation1 [shape = 'u32[144,128]{1,0:T(1,128)}', space=vmem, size = 0x12000, scoped, tag = 'internal scratch']
  %s0 = inlined_call_operand.hbm [shape: f32[64,128], index: 0, kind: input, shape index: {}]
  %s1 = inlined_call_operand.vmem [shape: f32[1,128], index: 1, kind: input, shape index: {}]
  %s2 = inlined_call_operand.vmem [shape: f32[1,128], index: 2, kind: input, shape index: {}]
  %s3 = inlined_call_operand.hbm [shape: bf16[128,128], index: 3, kind: input, shape index: {}]
  %s4 = inlined_call_operand.vmem [shape: f32[1,128], index: 4, kind: input, shape index: {}]
  %s5 = inlined_call_operand.hbm [shape: bf16[128,768], index: 5, kind: input, shape index: {}]
  %s6 = inlined_call_operand.vmem [shape: f32[1,768], index: 6, kind: input, shape index: {}]
  %s7 = inlined_call_operand.hbm [shape: f32[64,768], index: 7, kind: output, shape index: {}]
  %s8 = sld [smem:[#allocation0]]
  $region73: #{adapter_forward.1} parent=0
    _
  %s10 = ssub.s32 1, %s8
  %s11 = scalar_select 0, %s10, %s8
  $region1: #{adapter_forward.1} parent=0
    #allocation2 [shape = 'u8[16384]{0}', space=vmem, size = 0x4000, scoped, tag = 'input window, operand 0']
    #allocation3 [shape = 's32[2]{0}', space=sflag, size = 0x8, scoped, tag = 'scoped memory for adapter_forward.1']
    #allocation4 [shape = 's32[2]{0}', space=sflag, size = 0x8, scoped, tag = 'scoped memory for adapter_forward.1']
    #allocation5 [shape = 'u8[32768]{0}', space=vmem, size = 0x8000, scoped, tag = 'input window, operand 3, single buffered']
    #allocation6 [shape = 's32[1]{0}', space=sflag, size = 0x4, scoped, tag = 'scoped memory for adapter_forward.1']
    #allocation7 [shape = 'u8[196608]{0}', space=vmem, size = 0x30000, scoped, tag = 'input window, operand 5, single buffered']
    #allocation8 [shape = 'u8[98304]{0}', space=vmem, size = 0x18000, scoped, tag = 'output window, operand 0']
    %12 = vsyncpa [#allocation3], 0
    %s13 = scalar_lea.sflag [#allocation3], 1
    %14 = vsyncpa %s13, 0
    %15 = vsyncpa [#allocation6], 0
    %16 = vsyncpa [#allocation4], 0
    %s17 = scalar_lea.sflag [#allocation4], 1
    %18 = vsyncpa %s17, 0
    loop: start=0, step=1, limit=6
    $region2: #{adapter_forward.1} parent=1 // loop_pre_header
      _
    $region3: #{adapter_forward.1} parent=1 // loop_header
      %s20 = sphi 0, %s24
      %p21 = scmp.ge.s32.totalorder %s20, 6
      %s30 = sphi 0, %s32
      %s33 = sphi 0, %s30
      %s34 = sphi 0, %s33
      %s50 = sphi 0, %s34
      %s54 = sphi 0, %s54
      %s56 = sphi 0, %s54
      %s57 = sphi 0, %s56
      %s71 = sphi 0, %s57
      %s75 = sphi 0, %s75
      %s77 = sphi 0, %s75
      %s78 = sphi 0, %s77
      %s92 = sphi 0, %s78
      %s96 = sphi 0, %s96
      %s98 = sphi 0, %s96
      %s99 = sphi 0, %s98
      %s113 = sphi 0, %s99
      %s117 = sphi 0, %s117
      %s119 = sphi 0, %s117
      %s120 = sphi 0, %s119
      %s134 = sphi 0, %s120
      %s138 = sphi 0, %s138
      %s140 = sphi 0, %s138
      %s141 = sphi 0, %s140
      %s155 = sphi 0, %s141
      %s159 = sphi 0, %s159
      %s161 = sphi 0, %s159
      %s162 = sphi 0, %s161
      %s176 = sphi 0, %s162
      %s182 = sphi 0, %s184
      %s185 = sphi 0, %s182
      %s186 = sphi 0, %s185
      %s202 = sphi 0, %s186
    $region4: #{adapter_forward.1} parent=1 // loop_header_branch
      %23 = sbr.rel (%p21) target = $region8
    $region5: #{adapter_forward.1} parent=1 // loop_body
      %s25 = ssub.s32 %s20, 1
      %s26 = ssub.s32 %s20, 2
      %s27 = sadd.s32 %s20, 1
      %s28 = ssub.s32 %s20, %s27
      %p29 = scmp.eq.s32.totalorder %s28, 0
      %s31 = sadd.s32 %s30, 1
      %s32 = scalar_select %p29, %s30, %s31
      %p35 = pneg %p29
      %p36 = scmp.eq.s32.totalorder %s20, 3
      %p37 = por %p35, %p36
      %p38 = scmp.ne.s32.totalorder %s30, %s33
      %p39 = scmp.eq.s32.totalorder %s20, 0
      %p40 = por %p38, %p39
      %p41 = scmp.ne.s32.totalorder %s30, %s33
      %p42 = scmp.eq.s32.totalorder %s25, 3
      %p43 = por %p41, %p42
      %p44 = scmp.ne.s32.totalorder %s33, %s34
      %p45 = scmp.eq.s32.totalorder %s25, 0
      %p46 = por %p44, %p45
      %p47 = scmp.ne.s32.totalorder %s33, %s34
      %p48 = scmp.eq.s32.totalorder %s26, 3
      %p49 = por %p47, %p48
      %p51 = scmp.ne.s32.totalorder %s34, %s50
      %p52 = scmp.eq.s32.totalorder %s26, 0
      %p53 = por %p51, %p52
      %s55 = sadd.s32 %s54, 1
      %p58 = scmp.eq.s32.totalorder %s20, 3
      %p59 = scmp.ne.s32.totalorder %s54, %s56
      %p60 = scmp.eq.s32.totalorder %s20, 0
      %p61 = por %p59, %p60
      %p62 = scmp.ne.s32.totalorder %s54, %s56
      %p63 = scmp.eq.s32.totalorder %s25, 3
      %p64 = por %p62, %p63
      %p65 = scmp.ne.s32.totalorder %s56, %s57
      %p66 = scmp.eq.s32.totalorder %s25, 0
      %p67 = por %p65, %p66
      %p68 = scmp.ne.s32.totalorder %s56, %s57
      %p69 = scmp.eq.s32.totalorder %s26, 3
      %p70 = por %p68, %p69
      %p72 = scmp.ne.s32.totalorder %s57, %s71
      %p73 = scmp.eq.s32.totalorder %s26, 0
      %p74 = por %p72, %p73
      %s76 = sadd.s32 %s75, 1
      %p79 = scmp.eq.s32.totalorder %s20, 3
      %p80 = scmp.ne.s32.totalorder %s75, %s77
      %p81 = scmp.eq.s32.totalorder %s20, 0
      %p82 = por %p80, %p81
      %p83 = scmp.ne.s32.totalorder %s75, %s77
      %p84 = scmp.eq.s32.totalorder %s25, 3
      %p85 = por %p83, %p84
      %p86 = scmp.ne.s32.totalorder %s77, %s78
      %p87 = scmp.eq.s32.totalorder %s25, 0
      %p88 = por %p86, %p87
      %p89 = scmp.ne.s32.totalorder %s77, %s78
      %p90 = scmp.eq.s32.totalorder %s26, 3
      %p91 = por %p89, %p90
      %p93 = scmp.ne.s32.totalorder %s78, %s92
      %p94 = scmp.eq.s32.totalorder %s26, 0
      %p95 = por %p93, %p94
      %s97 = sadd.s32 %s96, 1
      %p100 = scmp.eq.s32.totalorder %s20, 3
      %p101 = scmp.ne.s32.totalorder %s96, %s98
      %p102 = scmp.eq.s32.totalorder %s20, 0
      %p103 = por %p101, %p102
      %p104 = scmp.ne.s32.totalorder %s96, %s98
      %p105 = scmp.eq.s32.totalorder %s25, 3
      %p106 = por %p104, %p105
      %p107 = scmp.ne.s32.totalorder %s98, %s99
      %p108 = scmp.eq.s32.totalorder %s25, 0
      %p109 = por %p107, %p108
      %p110 = scmp.ne.s32.totalorder %s98, %s99
      %p111 = scmp.eq.s32.totalorder %s26, 3
      %p112 = por %p110, %p111
      %p114 = scmp.ne.s32.totalorder %s99, %s113
      %p115 = scmp.eq.s32.totalorder %s26, 0
      %p116 = por %p114, %p115
      %s118 = sadd.s32 %s117, 1
      %p121 = scmp.eq.s32.totalorder %s20, 3
      %p122 = scmp.ne.s32.totalorder %s117, %s119
      %p123 = scmp.eq.s32.totalorder %s20, 0
      %p124 = por %p122, %p123
      %p125 = scmp.ne.s32.totalorder %s117, %s119
      %p126 = scmp.eq.s32.totalorder %s25, 3
      %p127 = por %p125, %p126
      %p128 = scmp.ne.s32.totalorder %s119, %s120
      %p129 = scmp.eq.s32.totalorder %s25, 0
      %p130 = por %p128, %p129
      %p131 = scmp.ne.s32.totalorder %s119, %s120
      %p132 = scmp.eq.s32.totalorder %s26, 3
      %p133 = por %p131, %p132
      %p135 = scmp.ne.s32.totalorder %s120, %s134
      %p136 = scmp.eq.s32.totalorder %s26, 0
      %p137 = por %p135, %p136
      %s139 = sadd.s32 %s138, 1
      %p142 = scmp.eq.s32.totalorder %s20, 3
      %p143 = scmp.ne.s32.totalorder %s138, %s140
      %p144 = scmp.eq.s32.totalorder %s20, 0
      %p145 = por %p143, %p144
      %p146 = scmp.ne.s32.totalorder %s138, %s140
      %p147 = scmp.eq.s32.totalorder %s25, 3
      %p148 = por %p146, %p147
      %p149 = scmp.ne.s32.totalorder %s140, %s141
      %p150 = scmp.eq.s32.totalorder %s25, 0
      %p151 = por %p149, %p150
      %p152 = scmp.ne.s32.totalorder %s140, %s141
      %p153 = scmp.eq.s32.totalorder %s26, 3
      %p154 = por %p152, %p153
      %p156 = scmp.ne.s32.totalorder %s141, %s155
      %p157 = scmp.eq.s32.totalorder %s26, 0
      %p158 = por %p156, %p157
      %s160 = sadd.s32 %s159, 1
      %p163 = scmp.eq.s32.totalorder %s20, 3
      %p164 = scmp.ne.s32.totalorder %s159, %s161
      %p165 = scmp.eq.s32.totalorder %s20, 0
      %p166 = por %p164, %p165
      %p167 = scmp.ne.s32.totalorder %s159, %s161
      %p168 = scmp.eq.s32.totalorder %s25, 3
      %p169 = por %p167, %p168
      %p170 = scmp.ne.s32.totalorder %s161, %s162
      %p171 = scmp.eq.s32.totalorder %s25, 0
      %p172 = por %p170, %p171
      %p173 = scmp.ne.s32.totalorder %s161, %s162
      %p174 = scmp.eq.s32.totalorder %s26, 3
      %p175 = por %p173, %p174
      %p177 = scmp.ne.s32.totalorder %s162, %s176
      %p178 = scmp.eq.s32.totalorder %s26, 0
      %p179 = por %p177, %p178
      %s180 = ssub.s32 %s20, %s27
      %p181 = scmp.eq.s32.totalorder %s180, 0
      %s183 = sadd.s32 %s182, 1
      %s184 = scalar_select %p181, %s182, %s183
      %p187 = pneg %p181
      %p188 = scmp.eq.s32.totalorder %s20, 3
      %p189 = por %p187, %p188
      %p190 = scmp.ne.s32.totalorder %s182, %s185
      %p191 = scmp.eq.s32.totalorder %s20, 0
      %p192 = por %p190, %p191
      %p193 = scmp.ne.s32.totalorder %s182, %s185
      %p194 = scmp.eq.s32.totalorder %s25, 3
      %p195 = por %p193, %p194
      %p196 = scmp.ne.s32.totalorder %s185, %s186
      %p197 = scmp.eq.s32.totalorder %s25, 0
      %p198 = por %p196, %p197
      %p199 = scmp.ne.s32.totalorder %s185, %s186
      %p200 = scmp.eq.s32.totalorder %s26, 3
      %p201 = por %p199, %p200
      %p203 = scmp.ne.s32.totalorder %s186, %s202
      %p204 = scmp.eq.s32.totalorder %s26, 0
      %p205 = por %p203, %p204
      %p206 = scmp.le.s32.totalorder 1, %s20
      %p207 = scmp.lt.s32.totalorder %s20, 5
      %p208 = pnand %p206, %p207
      %p209 = pneg %p208
      // Predicated region
      $region9: #{adapter_forward.1} parent=5 // pred_check
        _
      $region10: #{adapter_forward.1} parent=5 // pred_check_branch
        %211 = sbr.rel (%p208) target = $region12
      $region11: #{adapter_forward.1} parent=5 // pred_region
        %s212 = ssub.s32 %s20, 1
        // Predicated region
        $region13: #{adapter_forward.1} parent=11 // pred_check
          %p213 = pneg %p67
        $region14: #{adapter_forward.1} parent=11 // pred_check_branch
          %215 = sbr.rel (%p213) target = $region16
        $region15: #{adapter_forward.1} parent=11 // pred_region
          _
        $region16: #{adapter_forward.1} parent=11 // pred_fallthru
          _
        // Predicated region
        $region17: #{adapter_forward.1} parent=11 // pred_check
          %p216 = pneg %p88
        $region18: #{adapter_forward.1} parent=11 // pred_check_branch
          %218 = sbr.rel (%p216) target = $region20
        $region19: #{adapter_forward.1} parent=11 // pred_region
          _
        $region20: #{adapter_forward.1} parent=11 // pred_fallthru
          _
        // Predicated region
        $region21: #{adapter_forward.1} parent=11 // pred_check
          %p219 = pneg %p109
        $region22: #{adapter_forward.1} parent=11 // pred_check_branch
          %221 = sbr.rel (%p219) target = $region24
        $region23: #{adapter_forward.1} parent=11 // pred_region
          %s223 = ssub.s32 1024, 1024
          %224 = vsyncadd [#allocation6], %s223
          %s225 = sshll.u32 [#allocation5], 4
          %s226 = int_to_ptr.vmem [resolvable:$true] %s225
          %231 = dma.hbm_to_vmem [thread:$0]  %s3, 1024, %s226, [#allocation6], 64, 64, 4
        $region24: #{adapter_forward.1} parent=11 // pred_fallthru
          _
        // Predicated region
        $region25: #{adapter_forward.1} parent=11 // pred_check
          %p232 = pneg %p130
        $region26: #{adapter_forward.1} parent=11 // pred_check_branch
          %234 = sbr.rel (%p232) target = $region28
        $region27: #{adapter_forward.1} parent=11 // pred_region
          _
        $region28: #{adapter_forward.1} parent=11 // pred_fallthru
          _
        // Predicated region
        $region29: #{adapter_forward.1} parent=11 // pred_check
          %p235 = pneg %p151
        $region30: #{adapter_forward.1} parent=11 // pred_check_branch
          %237 = sbr.rel (%p235) target = $region32
        $region31: #{adapter_forward.1} parent=11 // pred_region
          %s239 = ssub.s32 6144, 6144
          %240 = vsyncadd [#allocation6], %s239
          %s241 = sshll.u32 [#allocation7], 4
          %s242 = int_to_ptr.vmem [resolvable:$true] %s241
          %247 = dma.hbm_to_vmem [thread:$0]  %s5, 6144, %s242, [#allocation6], 384, 384, 24
        $region32: #{adapter_forward.1} parent=11 // pred_fallthru
          _
        // Predicated region
        $region33: #{adapter_forward.1} parent=11 // pred_check
          %p248 = pneg %p172
        $region34: #{adapter_forward.1} parent=11 // pred_check_branch
          %250 = sbr.rel (%p248) target = $region36
        $region35: #{adapter_forward.1} parent=11 // pred_region
          _
        $region36: #{adapter_forward.1} parent=11 // pred_fallthru
          _
      $region12: #{adapter_forward.1} parent=5 // pred_fallthru
        _
      %p251 = scmp.lt.s32.totalorder %s20, 4
      // Predicated region
      $region37: #{adapter_forward.1} parent=5 // pred_check
        %p252 = pneg %p251
      $region38: #{adapter_forward.1} parent=5 // pred_check_branch
        %254 = sbr.rel (%p252) target = $region40
      $region39: #{adapter_forward.1} parent=5 // pred_region
        // Predicated region
        $region41: #{adapter_forward.1} parent=39 // pred_check
          %p255 = pneg %p40
        $region42: #{adapter_forward.1} parent=39 // pred_check_branch
          %257 = sbr.rel (%p255) target = $region44
        $region43: #{adapter_forward.1} parent=39 // pred_region
          %s258 = sand.u32 %s30, 1
          %s259 = scalar_lea.sflag [#allocation3], %s258
          %s260 = sand.u32 %s30, 1
          %s261 = smul.addr %s260, 16
          %s262 = scalar_lea.vmem [#allocation2], %s261
          %s263 = smul.u32 2, %s20
          %s265 = ssub.s32 256, 256
          %266 = vsyncadd %s259, %s265
          %s267 = smul.addr %s263, 128
          %s268 = scalar_lea.hbm %s0, %s267
          %s269 = sshll.u32 %s262, 4
          %s270 = int_to_ptr.vmem [resolvable:$true] %s269
          %275 = dma.hbm_to_vmem [thread:$0]  %s268, 256, %s270, %s259, 128, 128, 8
        $region44: #{adapter_forward.1} parent=39 // pred_fallthru
          _
      $region40: #{adapter_forward.1} parent=5 // pred_fallthru
        _
      %p276 = scmp.le.s32.totalorder 1, %s20
      %p277 = scmp.lt.s32.totalorder %s20, 5
      %p278 = pnand %p276, %p277
      %p279 = pneg %p278
      // Predicated region
      $region45: #{adapter_forward.1} parent=5 // pred_check
        _
      $region46: #{adapter_forward.1} parent=5 // pred_check_branch
        %281 = sbr.rel (%p278) target = $region48
      $region47: #{adapter_forward.1} parent=5 // pred_region
        %s282 = ssub.s32 %s20, 1
        %s283 = sand.u32 %s33, 1
        %s284 = scalar_lea.sflag [#allocation3], %s283
        %s285 = sand.u32 %s33, 1
        %s286 = smul.addr %s285, 16
        %s287 = scalar_lea.vmem [#allocation2], %s286
        // Predicated region
        $region49: #{adapter_forward.1} parent=47 // pred_check
          %p288 = pneg %p46
        $region50: #{adapter_forward.1} parent=47 // pred_check_branch
          %290 = sbr.rel (%p288) target = $region52
        $region51: #{adapter_forward.1} parent=47 // pred_region
          %291 = dma.done %s284, 256
        $region52: #{adapter_forward.1} parent=47 // pred_fallthru
          _
        // Predicated region
        $region53: #{adapter_forward.1} parent=47 // pred_check
          %p292 = pneg %p109
        $region54: #{adapter_forward.1} parent=47 // pred_check_branch
          %294 = sbr.rel (%p292) target = $region56
        $region55: #{adapter_forward.1} parent=47 // pred_region
          %295 = dma.done [#allocation6], 1024
        $region56: #{adapter_forward.1} parent=47 // pred_fallthru
          _
        // Predicated region
        $region57: #{adapter_forward.1} parent=47 // pred_check
          %p296 = pneg %p151
        $region58: #{adapter_forward.1} parent=47 // pred_check_branch
          %298 = sbr.rel (%p296) target = $region60
        $region59: #{adapter_forward.1} parent=47 // pred_region
          %299 = dma.done [#allocation6], 6144
        $region60: #{adapter_forward.1} parent=47 // pred_fallthru
          _
        %s300 = sand.u32 %s33, 1
        %s301 = scalar_lea.sflag [#allocation3], %s300
        %s302 = sand.u32 %s33, 1
        %s303 = smul.addr %s302, 16
        %s304 = scalar_lea.vmem [#allocation2], %s303
        %p305 = pneg %p46
        %p306 = pneg %p43
        %p307 = pneg %p67
        %p308 = pneg %p64
        %p309 = pneg %p88
        %p310 = pneg %p85
        %p311 = pneg %p109
        %p312 = pneg %p106
        %p313 = pneg %p130
        %p314 = pneg %p127
        %p315 = pneg %p151
        %p316 = pneg %p148
        %p317 = pneg %p172
        %p318 = pneg %p169
        %p319 = pneg %p198
        %p320 = pneg %p195
        %s321 = sand.u32 %s185, 1
        %s322 = scalar_lea.sflag [#allocation4], %s321
        %s323 = sand.u32 %s185, 1
        %s324 = smul.addr %s323, 96
        %s325 = scalar_lea.vmem [#allocation8], %s324
        %s326 = smul.u32 2, %s25
        %s327 = smul.u32 2, %s25
        %v329 = vld [vmem:[%s287] sm:$0xff]
        %v330 = vld [vmem:[%s287 + $0x8] sm:$0xff]
        %331 = vadd.xlane.f32.xlu0 %v329
        %v332 = vpop.xlane.xlu0 %331
        %333 = vadd.xlane.f32.xlu0 %v330
        %v334 = vpop.xlane.xlu0 %333
        %v335 = vrcp.pop 128.0
        %v336 = vmul.f32 %v332, %v335
        %v337 = vmul.f32 %v334, %v335
        %v338 = vmul.f32 %v329, %v329
        %v339 = vmul.f32 %v330, %v330
        %340 = vadd.xlane.f32.xlu0 %v338
        %v341 = vpop.xlane.xlu0 %340
        %342 = vadd.xlane.f32.xlu0 %v339
        %v343 = vpop.xlane.xlu0 %342
        %v344 = vmul.f32 %v341, %v335
        %v345 = vmul.f32 %v343, %v335
        %v346 = vmul.f32 %v336, %v336
        %v347 = vmul.f32 %v337, %v337
        %v348 = vsub.f32 %v344, %v346
        %v349 = vsub.f32 %v345, %v347
        %v350 = vmax.f32 %v348, 0.0
        %v351 = vmax.f32 %v349, 0.0
        %v352 = vsub.f32 %v329, %v336
        %v353 = vsub.f32 %v330, %v337
        %v354 = vadd.f32 %v350, 1e-05
        %v355 = vadd.f32 %v351, 1e-05
        %v356 = vrsqrt.pop %v354
        %v357 = vrsqrt.pop %v355
        %v358 = vmul.f32 %v352, %v356
        %v359 = vmul.f32 %v353, %v357
        %v360 = vld [vmem:[%s1] sm:$0x1]
        %v362 = vlaneseq
        %v363 = vshrl.u32 %v362, 7
        %v364 = vsub.s32 0, %v363
        %v365 = vrot.slane %v360, %v364
        %v367 = vmul.f32 %v358, %v365
        %v368 = vmul.f32 %v359, %v365
        %v369 = vld [vmem:[%s2] sm:$0x1]
        %v371 = vlaneseq
        %v372 = vshrl.u32 %v371, 7
        %v373 = vsub.s32 0, %v372
        %v374 = vrot.slane %v369, %v373
        %v376 = vadd.f32 %v367, %v374
        %v377 = vadd.f32 %v368, %v374
        %v378 = vpack.c.bf16 %v377, %v376
        %v379 = vld [vmem:[#allocation5] sm:$0xf]
        %v380 = vld [vmem:[#allocation5 + $0x4] sm:$0xf]
        %v381 = vld [vmem:[#allocation5 + $0x8] sm:$0xf]
        %v382 = vld [vmem:[#allocation5 + $0xc] sm:$0xf]
        %v383 = vld [vmem:[#allocation5 + $0x10] sm:$0xf]
        %v384 = vld [vmem:[#allocation5 + $0x14] sm:$0xf]
        %v385 = vld [vmem:[#allocation5 + $0x18] sm:$0xf]
        %v386 = vld [vmem:[#allocation5 + $0x1c] sm:$0xf]
        %v387 = vld [vmem:[#allocation5 + $0x20] sm:$0xf]
        %v388 = vld [vmem:[#allocation5 + $0x24] sm:$0xf]
        %v389 = vld [vmem:[#allocation5 + $0x28] sm:$0xf]
        %v390 = vld [vmem:[#allocation5 + $0x2c] sm:$0xf]
        %v391 = vld [vmem:[#allocation5 + $0x30] sm:$0xf]
        %v392 = vld [vmem:[#allocation5 + $0x34] sm:$0xf]
        %v393 = vld [vmem:[#allocation5 + $0x38] sm:$0xf]
        %v394 = vld [vmem:[#allocation5 + $0x3c] sm:$0xf]
        %v395 = vld [vmem:[%s4] sm:$0x1]
        %v397 = vlaneseq
        %v398 = vshrl.u32 %v397, 7
        %v399 = vsub.s32 0, %v398
        %v400 = vrot.slane %v395, %v399
        %v418 = vunpack.c.l.b16 %v379
        %v419 = vunpack.c.l.b16 %v380
        %v420 = vunpack.c.l.b16 %v381
        %v421 = vunpack.c.l.b16 %v382
        %v422 = vunpack.c.l.b16 %v383
        %v423 = vunpack.c.l.b16 %v384
        %v424 = vunpack.c.l.b16 %v385
        %v425 = vunpack.c.l.b16 %v386
        %v426 = vunpack.c.l.b16 %v387
        %v427 = vunpack.c.l.b16 %v388
        %v428 = vunpack.c.l.b16 %v389
        %v429 = vunpack.c.l.b16 %v390
        %v430 = vunpack.c.l.b16 %v391
        %v431 = vunpack.c.l.b16 %v392
        %v432 = vunpack.c.l.b16 %v393
        %v433 = vunpack.c.l.b16 %v394
        %v434 = vpack.c.b16 %v419, %v418
        %v435 = vpack.c.b16 %v421, %v420
        %v436 = vpack.c.b16 %v423, %v422
        %v437 = vpack.c.b16 %v425, %v424
        %v438 = vpack.c.b16 %v427, %v426
        %v439 = vpack.c.b16 %v429, %v428
        %v440 = vpack.c.b16 %v431, %v430
        %v441 = vpack.c.b16 %v433, %v432
        %450 = vmatprep.subr.bf16.mxu0 0
        %451 = vmatpush1.bf16.msra.mxu0 %v434
        %452 = vmatprep.subr.bf16.mxu0 0
        %453 = vmatpush1.bf16.msra.mxu0 %v435
        %454 = vmatprep.subr.bf16.mxu0 0
        %455 = vmatpush1.bf16.msra.mxu0 %v436
        %456 = vmatprep.subr.bf16.mxu0 0
        %457 = vmatpush1.bf16.msra.mxu0 %v437
        %458 = vmatprep.subr.bf16.mxu0 0
        %459 = vmatpush1.bf16.msra.mxu0 %v438
        %460 = vmatprep.subr.bf16.mxu0 0
        %461 = vmatpush1.bf16.msra.mxu0 %v439
        %462 = vmatprep.subr.bf16.mxu0 0
        %463 = vmatpush1.bf16.msra.mxu0 %v440
        %464 = vmatprep.subr.bf16.mxu0 0
        %465 = vmatpush1.bf16.msra.mxu0 %v441
        %466 = vmatprep.subr.bf16.mxu0 0
        %467 = vmatpush1.bf16.msra.mxu0 0
        %468 = vmatprep.subr.bf16.mxu0 0
        %469 = vmatpush1.bf16.msra.mxu0 0
        %470 = vmatprep.subr.bf16.mxu0 0
        %471 = vmatpush1.bf16.msra.mxu0 0
        %472 = vmatprep.subr.bf16.mxu0 0
        %473 = vmatpush1.bf16.msra.mxu0 0
        %474 = vmatprep.subr.bf16.mxu0 0
        %475 = vmatpush1.bf16.msra.mxu0 0
        %476 = vmatprep.subr.bf16.mxu0 0
        %477 = vmatpush1.bf16.msra.mxu0 0
        %478 = vmatprep.subr.bf16.mxu0 0
        %479 = vmatpush1.bf16.msra.mxu0 0
        %480 = vmatprep.subr.bf16.mxu0 0
        %481 = vmatpush1.bf16.msra.mxu0 0
        %482 = vmatprep.mubr.bf16.mxu0 0
        %483 = vmatmul.mubr.bf16.gmra.mrb[0].mxu0 %v378
        %v484 = vpop.f32.mrb[0].mxu0
        %v485 = vadd.f32 %v400, %v484
        %v486 = vpop.f32.mrb[0].mxu0
        %v487 = vpop.f32.mrb[0].mxu0
        %v488 = vadd.f32 %v400, %v487
        %v489 = vpop.f32.mrb[0].mxu0
        %490 = vdwg.mxu0
        %v491 = vmax.f32 %v485, 0.0
        %v492 = vmax.f32 %v488, 0.0
        %v493 = vpack.c.bf16 %v492, %v491
        %v494 = vld [vmem:[#allocation7] sm:$0xff]
        %v495 = vld [vmem:[#allocation7 + $0x8] sm:$0xff]
        %v496 = vld [vmem:[#allocation7 + $0x10] sm:$0xff]
        %v497 = vld [vmem:[#allocation7 + $0x18] sm:$0xff]
        %v498 = vld [vmem:[#allocation7 + $0x20] sm:$0xff]
        %v499 = vld [vmem:[#allocation7 + $0x28] sm:$0xff]
        %v500 = vld [vmem:[#allocation7 + $0x30] sm:$0xff]
        %v501 = vld [vmem:[#allocation7 + $0x38] sm:$0xff]
        %v502 = vld [vmem:[#allocation7 + $0x40] sm:$0xff]
        %v503 = vld [vmem:[#allocation7 + $0x48] sm:$0xff]
        %v504 = vld [vmem:[#allocation7 + $0x50] sm:$0xff]
        %v505 = vld [vmem:[#allocation7 + $0x58] sm:$0xff]
        %v506 = vld [vmem:[#allocation7 + $0x60] sm:$0xff]
        %v507 = vld [vmem:[#allocation7 + $0x68] sm:$0xff]
        %v508 = vld [vmem:[#allocation7 + $0x70] sm:$0xff]
        %v509 = vld [vmem:[#allocation7 + $0x78] sm:$0xff]
        %v510 = vld [vmem:[#allocation7 + $0x80] sm:$0xff]
        %v511 = vld [vmem:[#allocation7 + $0x88] sm:$0xff]
        %v512 = vld [vmem:[#allocation7 + $0x90] sm:$0xff]
        %v513 = vld [vmem:[#allocation7 + $0x98] sm:$0xff]
        %v514 = vld [vmem:[#allocation7 + $0xa0] sm:$0xff]
        %v515 = vld [vmem:[#allocation7 + $0xa8] sm:$0xff]
        %v516 = vld [vmem:[#allocation7 + $0xb0] sm:$0xff]
        %v517 = vld [vmem:[#allocation7 + $0xb8] sm:$0xff]
        %v518 = vld [vmem:[#allocation7 + $0xc0] sm:$0xff]
        %v519 = vld [vmem:[#allocation7 + $0xc8] sm:$0xff]
        %v520 = vld [vmem:[#allocation7 + $0xd0] sm:$0xff]
        %v521 = vld [vmem:[#allocation7 + $0xd8] sm:$0xff]
        %v522 = vld [vmem:[#allocation7 + $0xe0] sm:$0xff]
        %v523 = vld [vmem:[#allocation7 + $0xe8] sm:$0xff]
        %v524 = vld [vmem:[#allocation7 + $0xf0] sm:$0xff]
        %v525 = vld [vmem:[#allocation7 + $0xf8] sm:$0xff]
        %v526 = vld [vmem:[#allocation7 + $0x100] sm:$0xff]
        %v527 = vld [vmem:[#allocation7 + $0x108] sm:$0xff]
        %v528 = vld [vmem:[#allocation7 + $0x110] sm:$0xff]
        %v529 = vld [vmem:[#allocation7 + $0x118] sm:$0xff]
        %v530 = vld [vmem:[#allocation7 + $0x120] sm:$0xff]
        %v531 = vld [vmem:[#allocation7 + $0x128] sm:$0xff]
        %v532 = vld [vmem:[#allocation7 + $0x130] sm:$0xff]
        %v533 = vld [vmem:[#allocation7 + $0x138] sm:$0xff]
        %v534 = vld [vmem:[#allocation7 + $0x140] sm:$0xff]
        %v535 = vld [vmem:[#allocation7 + $0x148] sm:$0xff]
        %v536 = vld [vmem:[#allocation7 + $0x150] sm:$0xff]
        %v537 = vld [vmem:[#allocation7 + $0x158] sm:$0xff]
        %v538 = vld [vmem:[#allocation7 + $0x160] sm:$0xff]
        %v539 = vld [vmem:[#allocation7 + $0x168] sm:$0xff]
        %v540 = vld [vmem:[#allocation7 + $0x170] sm:$0xff]
        %v541 = vld [vmem:[#allocation7 + $0x178] sm:$0xff]
        %v542 = vld [vmem:[%s6] sm:$0x3f]
        %v544 = vlaneseq
        %v545 = vshrl.u32 %v544, 7
        %v546 = vsub.s32 0, %v545
        %v547 = vrot.slane %v542, %v546
        %v548 = vlaneseq
        %v549 = vshrl.u32 %v548, 7
        %v550 = vsub.s32 1, %v549
        %v551 = vrot.slane %v542, %v550
        %v552 = vlaneseq
        %v553 = vshrl.u32 %v552, 7
        %v554 = vsub.s32 2, %v553
        %v555 = vrot.slane %v542, %v554
        %v556 = vlaneseq
        %v557 = vshrl.u32 %v556, 7
        %v558 = vsub.s32 3, %v557
        %v559 = vrot.slane %v542, %v558
        %v560 = vlaneseq
        %v561 = vshrl.u32 %v560, 7
        %v562 = vsub.s32 4, %v561
        %v563 = vrot.slane %v542, %v562
        %v564 = vlaneseq
        %v565 = vshrl.u32 %v564, 7
        %v566 = vsub.s32 5, %v565
        %v567 = vrot.slane %v542, %v566
        %v622 = vunpack.c.l.b16 %v494
        %v623 = vunpack.c.h.b16 %v494
        %v624 = vunpack.c.l.b16 %v495
        %v625 = vunpack.c.h.b16 %v495
        %v626 = vunpack.c.l.b16 %v496
        %v627 = vunpack.c.h.b16 %v496
        %v628 = vunpack.c.l.b16 %v497
        %v629 = vunpack.c.h.b16 %v497
        %v630 = vunpack.c.l.b16 %v498
        %v631 = vunpack.c.h.b16 %v498
        %v632 = vunpack.c.l.b16 %v499
        %v633 = vunpack.c.h.b16 %v499
        %v634 = vunpack.c.l.b16 %v500
        %v635 = vunpack.c.h.b16 %v500
        %v636 = vunpack.c.l.b16 %v501
        %v637 = vunpack.c.h.b16 %v501
        %v638 = vunpack.c.l.b16 %v502
        %v639 = vunpack.c.h.b16 %v502
        %v640 = vunpack.c.l.b16 %v503
        %v641 = vunpack.c.h.b16 %v503
        %v642 = vunpack.c.l.b16 %v504
        %v643 = vunpack.c.h.b16 %v504
        %v644 = vunpack.c.l.b16 %v505
        %v645 = vunpack.c.h.b16 %v505
        %v646 = vunpack.c.l.b16 %v506
        %v647 = vunpack.c.h.b16 %v506
        %v648 = vunpack.c.l.b16 %v507
        %v649 = vunpack.c.h.b16 %v507
        %v650 = vunpack.c.l.b16 %v508
        %v651 = vunpack.c.h.b16 %v508
        %v652 = vunpack.c.l.b16 %v509
        %v653 = vunpack.c.h.b16 %v509
        %v654 = vunpack.c.l.b16 %v510
        %v655 = vunpack.c.h.b16 %v510
        %v656 = vunpack.c.l.b16 %v511
        %v657 = vunpack.c.h.b16 %v511
        %v658 = vunpack.c.l.b16 %v512
        %v659 = vunpack.c.h.b16 %v512
        %v660 = vunpack.c.l.b16 %v513
        %v661 = vunpack.c.h.b16 %v513
        %v662 = vunpack.c.l.b16 %v514
        %v663 = vunpack.c.h.b16 %v514
        %v664 = vunpack.c.l.b16 %v515
        %v665 = vunpack.c.h.b16 %v515
        %v666 = vunpack.c.l.b16 %v516
        %v667 = vunpack.c.h.b16 %v516
        %v668 = vunpack.c.l.b16 %v517
        %v669 = vunpack.c.h.b16 %v517
        %v670 = vunpack.c.l.b16 %v518
        %v671 = vunpack.c.h.b16 %v518
        %v672 = vunpack.c.l.b16 %v519
        %v673 = vunpack.c.h.b16 %v519
        %v674 = vunpack.c.l.b16 %v520
        %v675 = vunpack.c.h.b16 %v520
        %v676 = vunpack.c.l.b16 %v521
        %v677 = vunpack.c.h.b16 %v521
        %v678 = vunpack.c.l.b16 %v522
        %v679 = vunpack.c.h.b16 %v522
        %v680 = vunpack.c.l.b16 %v523
        %v681 = vunpack.c.h.b16 %v523
        %v682 = vunpack.c.l.b16 %v524
        %v683 = vunpack.c.h.b16 %v524
        %v684 = vunpack.c.l.b16 %v525
        %v685 = vunpack.c.h.b16 %v525
        %v686 = vunpack.c.l.b16 %v526
        %v687 = vunpack.c.h.b16 %v526
        %v688 = vunpack.c.l.b16 %v527
        %v689 = vunpack.c.h.b16 %v527
        %v690 = vunpack.c.l.b16 %v528
        %v691 = vunpack.c.h.b16 %v528
        %v692 = vunpack.c.l.b16 %v529
        %v693 = vunpack.c.h.b16 %v529
        %v694 = vunpack.c.l.b16 %v530
        %v695 = vunpack.c.h.b16 %v530
        %v696 = vunpack.c.l.b16 %v531
        %v697 = vunpack.c.h.b16 %v531
        %v698 = vunpack.c.l.b16 %v532
        %v699 = vunpack.c.h.b16 %v532
        %v700 = vunpack.c.l.b16 %v533
        %v701 = vunpack.c.h.b16 %v533
        %v702 = vunpack.c.l.b16 %v534
        %v703 = vunpack.c.h.b16 %v534
        %v704 = vunpack.c.l.b16 %v535
        %v705 = vunpack.c.h.b16 %v535
        %v706 = vunpack.c.l.b16 %v536
        %v707 = vunpack.c.h.b16 %v536
        %v708 = vunpack.c.l.b16 %v537
        %v709 = vunpack.c.h.b16 %v537
        %v710 = vunpack.c.l.b16 %v538
        %v711 = vunpack.c.h.b16 %v538
        %v712 = vunpack.c.l.b16 %v539
        %v713 = vunpack.c.h.b16 %v539
        %v714 = vunpack.c.l.b16 %v540
        %v715 = vunpack.c.h.b16 %v540
        %v716 = vunpack.c.l.b16 %v541
        %v717 = vunpack.c.h.b16 %v541
        %v718 = vpack.c.b16 %v628, %v622
        %v719 = vpack.c.b16 %v629, %v623
        %v720 = vpack.c.b16 %v630, %v624
        %v721 = vpack.c.b16 %v631, %v625
        %v722 = vpack.c.b16 %v632, %v626
        %v723 = vpack.c.b16 %v633, %v627
        %v724 = vpack.c.b16 %v640, %v634
        %v725 = vpack.c.b16 %v641, %v635
        %v726 = vpack.c.b16 %v642, %v636
        %v727 = vpack.c.b16 %v643, %v637
        %v728 = vpack.c.b16 %v644, %v638
        %v729 = vpack.c.b16 %v645, %v639
        %v730 = vpack.c.b16 %v652, %v646
        %v731 = vpack.c.b16 %v653, %v647
        %v732 = vpack.c.b16 %v654, %v648
        %v733 = vpack.c.b16 %v655, %v649
        %v734 = vpack.c.b16 %v656, %v650
        %v735 = vpack.c.b16 %v657, %v651
        %v736 = vpack.c.b16 %v664, %v658
        %v737 = vpack.c.b16 %v665, %v659
        %v738 = vpack.c.b16 %v666, %v660
        %v739 = vpack.c.b16 %v667, %v661
        %v740 = vpack.c.b16 %v668, %v662
        %v741 = vpack.c.b16 %v669, %v663
        %v742 = vpack.c.b16 %v676, %v670
        %v743 = vpack.c.b16 %v677, %v671
        %v744 = vpack.c.b16 %v678, %v672
        %v745 = vpack.c.b16 %v679, %v673
        %v746 = vpack.c.b16 %v680, %v674
        %v747 = vpack.c.b16 %v681, %v675
        %v748 = vpack.c.b16 %v688, %v682
        %v749 = vpack.c.b16 %v689, %v683
        %v750 = vpack.c.b16 %v690, %v684
        %v751 = vpack.c.b16 %v691, %v685
        %v752 = vpack.c.b16 %v692, %v686
        %v753 = vpack.c.b16 %v693, %v687
        %v754 = vpack.c.b16 %v700, %v694
        %v755 = vpack.c.b16 %v701, %v695
        %v756 = vpack.c.b16 %v702, %v696
        %v757 = vpack.c.b16 %v703, %v697
        %v758 = vpack.c.b16 %v704, %v698
        %v759 = vpack.c.b16 %v705, %v699
        %v760 = vpack.c.b16 %v712, %v706
        %v761 = vpack.c.b16 %v713, %v707
        %v762 = vpack.c.b16 %v714, %v708
        %v763 = vpack.c.b16 %v715, %v709
        %v764 = vpack.c.b16 %v716, %v710
        %v765 = vpack.c.b16 %v717, %v711
        %814 = vmatprep.subr.bf16.mxu0 %v719
        %815 = vmatpush1.bf16.msra.mxu0 %v718
        %816 = vmatprep.subr.bf16.mxu0 %v725
        %817 = vmatpush1.bf16.msra.mxu0 %v724
        %818 = vmatprep.subr.bf16.mxu0 %v731
        %819 = vmatpush1.bf16.msra.mxu0 %v730
        %820 = vmatprep.subr.bf16.mxu0 %v737
        %821 = vmatpush1.bf16.msra.mxu0 %v736
        %822 = vmatprep.subr.bf16.mxu0 %v743
        %823 = vmatpush1.bf16.msra.mxu0 %v742
        %824 = vmatprep.subr.bf16.mxu0 %v749
        %825 = vmatpush1.bf16.msra.mxu0 %v748
        %826 = vmatprep.subr.bf16.mxu0 %v755
        %827 = vmatpush1.bf16.msra.mxu0 %v754
        %828 = vmatprep.subr.bf16.mxu0 %v761
        %829 = vmatpush1.bf16.msra.mxu0 %v760
        %830 = vmatprep.subr.bf16.mxu0 0
        %831 = vmatpush1.bf16.msra.mxu0 0
        %832 = vmatprep.subr.bf16.mxu0 0
        %833 = vmatpush1.bf16.msra.mxu0 0
        %834 = vmatprep.subr.bf16.mxu0 0
        %835 = vmatpush1.bf16.msra.mxu0 0
        %836 = vmatprep.subr.bf16.mxu0 0
        %837 = vmatpush1.bf16.msra.mxu0 0
        %838 = vmatprep.subr.bf16.mxu0 0
        %839 = vmatpush1.bf16.msra.mxu0 0
        %840 = vmatprep.subr.bf16.mxu0 0
        %841 = vmatpush1.bf16.msra.mxu0 0
        %842 = vmatprep.subr.bf16.mxu0 0
        %843 = vmatpush1.bf16.msra.mxu0 0
        %844 = vmatprep.subr.bf16.mxu0 0
        %845 = vmatpush1.bf16.msra.mxu0 0
        %846 = vmatprep.mubr.bf16.mxu0 0
        %847 = vmatmul.mubr.bf16.gmra.mrb[0].mxu0 %v493
        %v848 = vpop.f32.mrb[0].mxu0
        %v849 = vadd.f32 %v547, %v848
        %v850 = vpop.f32.mrb[0].mxu0
        %v851 = vadd.f32 %v551, %v850
        %v852 = vpop.f32.mrb[0].mxu0
        %v853 = vadd.f32 %v547, %v852
        %v854 = vpop.f32.mrb[0].mxu0
        %v855 = vadd.f32 %v551, %v854
        %856 = vdwg.mxu0
        %857 = vmatprep.subr.bf16.mxu0 %v721
        %858 = vmatpush1.bf16.msra.mxu0 %v720
        %859 = vmatprep.subr.bf16.mxu0 %v727
        %860 = vmatpush1.bf16.msra.mxu0 %v726
        %861 = vmatprep.subr.bf16.mxu0 %v733
        %862 = vmatpush1.bf16.msra.mxu0 %v732
        %863 = vmatprep.subr.bf16.mxu0 %v739
        %864 = vmatpush1.bf16.msra.mxu0 %v738
        %865 = vmatprep.subr.bf16.mxu0 %v745
        %866 = vmatpush1.bf16.msra.mxu0 %v744
        %867 = vmatprep.subr.bf16.mxu0 %v751
        %868 = vmatpush1.bf16.msra.mxu0 %v750
        %869 = vmatprep.subr.bf16.mxu0 %v757
        %870 = vmatpush1.bf16.msra.mxu0 %v756
        %871 = vmatprep.subr.bf16.mxu0 %v763
        %872 = vmatpush1.bf16.msra.mxu0 %v762
        %873 = vmatprep.subr.bf16.mxu0 0
        %874 = vmatpush1.bf16.msra.mxu0 0
        %875 = vmatprep.subr.bf16.mxu0 0
        %876 = vmatpush1.bf16.msra.mxu0 0
        %877 = vmatprep.subr.bf16.mxu0 0
        %878 = vmatpush1.bf16.msra.mxu0 0
        %879 = vmatprep.subr.bf16.mxu0 0
        %880 = vmatpush1.bf16.msra.mxu0 0
        %881 = vmatprep.subr.bf16.mxu0 0
        %882 = vmatpush1.bf16.msra.mxu0 0
        %883 = vmatprep.subr.bf16.mxu0 0
        %884 = vmatpush1.bf16.msra.mxu0 0
        %885 = vmatprep.subr.bf16.mxu0 0
        %886 = vmatpush1.bf16.msra.mxu0 0
        %887 = vmatprep.subr.bf16.mxu0 0
        %888 = vmatpush1.bf16.msra.mxu0 0
        %889 = vmatprep.mubr.bf16.mxu0 0
        %890 = vmatmul.mubr.bf16.gmra.mrb[0].mxu0 %v493
        %v891 = vpop.f32.mrb[0].mxu0
        %v892 = vadd.f32 %v555, %v891
        %v893 = vpop.f32.mrb[0].mxu0
        %v894 = vadd.f32 %v559, %v893
        %v895 = vpop.f32.mrb[0].mxu0
        %v896 = vadd.f32 %v555, %v895
        %v897 = vpop.f32.mrb[0].mxu0
        %v898 = vadd.f32 %v559, %v897
        %899 = vdwg.mxu0
        %900 = vmatprep.subr.bf16.mxu0 %v723
        %901 = vmatpush1.bf16.msra.mxu0 %v722
        %902 = vmatprep.subr.bf16.mxu0 %v729
        %903 = vmatpush1.bf16.msra.mxu0 %v728
        %904 = vmatprep.subr.bf16.mxu0 %v735
        %905 = vmatpush1.bf16.msra.mxu0 %v734
        %906 = vmatprep.subr.bf16.mxu0 %v741
        %907 = vmatpush1.bf16.msra.mxu0 %v740
        %908 = vmatprep.subr.bf16.mxu0 %v747
        %909 = vmatpush1.bf16.msra.mxu0 %v746
        %910 = vmatprep.subr.bf16.mxu0 %v753
        %911 = vmatpush1.bf16.msra.mxu0 %v752
        %912 = vmatprep.subr.bf16.mxu0 %v759
        %913 = vmatpush1.bf16.msra.mxu0 %v758
        %914 = vmatprep.subr.bf16.mxu0 %v765
        %915 = vmatpush1.bf16.msra.mxu0 %v764
        %916 = vmatprep.subr.bf16.mxu0 0
        %917 = vmatpush1.bf16.msra.mxu0 0
        %918 = vmatprep.subr.bf16.mxu0 0
        %919 = vmatpush1.bf16.msra.mxu0 0
        %920 = vmatprep.subr.bf16.mxu0 0
        %921 = vmatpush1.bf16.msra.mxu0 0
        %922 = vmatprep.subr.bf16.mxu0 0
        %923 = vmatpush1.bf16.msra.mxu0 0
        %924 = vmatprep.subr.bf16.mxu0 0
        %925 = vmatpush1.bf16.msra.mxu0 0
        %926 = vmatprep.subr.bf16.mxu0 0
        %927 = vmatpush1.bf16.msra.mxu0 0
        %928 = vmatprep.subr.bf16.mxu0 0
        %929 = vmatpush1.bf16.msra.mxu0 0
        %930 = vmatprep.subr.bf16.mxu0 0
        %931 = vmatpush1.bf16.msra.mxu0 0
        %932 = vmatprep.mubr.bf16.mxu0 0
        %933 = vmatmul.mubr.bf16.gmra.mrb[0].mxu0 %v493
        %v934 = vpop.f32.mrb[0].mxu0
        %v935 = vadd.f32 %v563, %v934
        %v936 = vpop.f32.mrb[0].mxu0
        %v937 = vadd.f32 %v567, %v936
        %v938 = vpop.f32.mrb[0].mxu0
        %v939 = vadd.f32 %v563, %v938
        %v940 = vpop.f32.mrb[0].mxu0
        %v941 = vadd.f32 %v567, %v940
        %942 = vdwg.mxu0
        %v943 = vmax.f32 %v849, 0.0
        %v944 = vmax.f32 %v851, 0.0
        %v945 = vmax.f32 %v892, 0.0
        %v946 = vmax.f32 %v894, 0.0
        %v947 = vmax.f32 %v935, 0.0
        %v948 = vmax.f32 %v937, 0.0
        %v949 = vmax.f32 %v853, 0.0
        %v950 = vmax.f32 %v855, 0.0
        %v951 = vmax.f32 %v896, 0.0
        %v952 = vmax.f32 %v898, 0.0
        %v953 = vmax.f32 %v939, 0.0
        %v954 = vmax.f32 %v941, 0.0
        %955 = vst [vmem:[%s325] sm:$0xff] %v943
        %956 = vst [vmem:[%s325 + $0x8] sm:$0xff] %v944
        %957 = vst [vmem:[%s325 + $0x10] sm:$0xff] %v945
        %958 = vst [vmem:[%s325 + $0x18] sm:$0xff] %v946
        %959 = vst [vmem:[%s325 + $0x20] sm:$0xff] %v947
        %960 = vst [vmem:[%s325 + $0x28] sm:$0xff] %v948
        %961 = vst [vmem:[%s325 + $0x30] sm:$0xff] %v949
        %962 = vst [vmem:[%s325 + $0x38] sm:$0xff] %v950
        %963 = vst [vmem:[%s325 + $0x40] sm:$0xff] %v951
        %964 = vst [vmem:[%s325 + $0x48] sm:$0xff] %v952
        %965 = vst [vmem:[%s325 + $0x50] sm:$0xff] %v953
        %966 = vst [vmem:[%s325 + $0x58] sm:$0xff] %v954
        %s967 = sand.u32 %s185, 1
        %s968 = scalar_lea.sflag [#allocation4], %s967
        %s969 = sand.u32 %s185, 1
        %s970 = smul.addr %s969, 96
        %s971 = scalar_lea.vmem [#allocation8], %s970
        // Predicated region
        $region61: #{adapter_forward.1} parent=47 // pred_check
          %p972 = pneg %p195
        $region62: #{adapter_forward.1} parent=47 // pred_check_branch
          %974 = sbr.rel (%p972) target = $region64
        $region63: #{adapter_forward.1} parent=47 // pred_region
          %s975 = smul.u32 2, %s25
          %s977 = ssub.s32 1536, 1536
          %978 = vsyncadd %s968, %s977
          %s979 = smul.addr %s975, 6
          %s980 = smul.addr %s979, 128
          %s981 = scalar_lea.hbm %s7, %s980
          %s982 = sshll.u32 %s971, 4
          %s983 = int_to_ptr.vmem [resolvable:$true] %s982
          %988 = dma.vmem_to_hbm [thread:$0]  %s983, 1536, %s981, %s968, 768, 768, 48
        $region64: #{adapter_forward.1} parent=47 // pred_fallthru
          _
      $region48: #{adapter_forward.1} parent=5 // pred_fallthru
        _
      %p989 = scmp.le.s32.totalorder 2, %s20
      // Predicated region
      $region65: #{adapter_forward.1} parent=5 // pred_check
        %p990 = pneg %p989
      $region66: #{adapter_forward.1} parent=5 // pred_check_branch
        %992 = sbr.rel (%p990) target = $region68
      $region67: #{adapter_forward.1} parent=5 // pred_region
        %s993 = ssub.s32 %s20, 2
        // Predicated region
        $region69: #{adapter_forward.1} parent=67 // pred_check
          %p994 = pneg %p201
        $region70: #{adapter_forward.1} parent=67 // pred_check_branch
          %996 = sbr.rel (%p994) target = $region72
        $region71: #{adapter_forward.1} parent=67 // pred_region
          %s997 = sand.u32 %s186, 1
          %s998 = scalar_lea.sflag [#allocation4], %s997
          %s999 = sand.u32 %s186, 1
          %s1000 = smul.addr %s999, 96
          %s1001 = scalar_lea.vmem [#allocation8], %s1000
          %1002 = dma.done %s998, 1536
        $region72: #{adapter_forward.1} parent=67 // pred_fallthru
          _
      $region68: #{adapter_forward.1} parent=5 // pred_fallthru
        _
    $region6: #{adapter_forward.1} parent=1 // loop_footer
      %s24 = sadd.s32 1, %s20
    $region7: #{adapter_forward.1} parent=1 // loop_footer_branch
      %19 = sbr.rel target = $region3
    $region8: #{adapter_forward.1} parent=1 // loop_exit
      _
    %1003 = vsyncpa [#allocation3], 1
    %s1004 = scalar_lea.sflag [#allocation3], 1
    %1005 = vsyncpa %s1004, 1
    %1006 = vsyncpa [#allocation6], 1
    %1007 = vsyncpa [#allocation4], 1
    %s1008 = scalar_lea.sflag [#allocation4], 1
    %1009 = vsyncpa %s1008, 1

</llo_original>
